<compile_context>
chip_gen: v7x
topology: tpu7x:2x2x1
jax: 0.10.0
libtpu: 0.0.40
codegen_flags: <defaults>
</compile_context>

<pallas_src>
import functools

import jax
import jax.numpy as jnp
from jax.experimental import pallas as pl
from jax.experimental.pallas import tpu as pltpu

INPUT_DIM = 106
HIDDEN_DIM = 32
OUTPUT_DIM = 1


def _round_up(a, m):
    return (a + m - 1) // m * m


def _pick_block_b(B, block_b):
    """Batch-tile rows: multiple of 128 (lane-dense output stores) when the batch allows
    it, and capped so the grid has >= 2 steps (v7x megacore sharding + pipelining)."""
    if B <= 128:
        return _round_up(max(B, 1), 8)          # single small tile
    half = _round_up(pl.cdiv(B, 2), 128)        # guarantees >= 2 grid steps
    bb = min(max(block_b, 128), half)
    return max(128, bb - bb % 128)


def _mlp_kernel(x_ref, w1_ref, b1_ref, w2_ref, b2_ref, w3t_ref, b3_ref, o_ref):
    # x_ref: (bb, 106) f32 (streamed). Weights/biases: f32, VMEM-resident across the grid
    # (constant index_map -> DMA'd once). b3_ref: (1,) f32 scalar in SMEM.
    # o_ref: (1, 1, bb) f32 -- batch packed into lanes.
    x = x_ref[...]

    # Layer 1: (bb, 106) @ (106, 32) on the MXU, + bias, ReLU.
    h1 = jnp.dot(x, w1_ref[...], preferred_element_type=jnp.float32) + b1_ref[...]
    h1 = jnp.maximum(h1, 0.0)

    # Layer 2: (bb, 32) @ (32, 32).
    h2 = jnp.dot(h1, w2_ref[...], preferred_element_type=jnp.float32) + b2_ref[...]
    h2 = jnp.maximum(h2, 0.0)

    # Layer 3, transposed: (1, 32) contracted with (bb, 32) on the shared hid axis
    # -> (1, bb). Batch lands in lanes, so the store is a dense 128-wide vst instead of
    # a masked single-column store.
    logits_t = jax.lax.dot_general(
        w3t_ref[...], h2,
        dimension_numbers=(((1,), (1,)), ((), ())),
        preferred_element_type=jnp.float32)
    o_ref[0] = jax.nn.sigmoid(logits_t + b3_ref[0])


@functools.partial(jax.jit, static_argnames=("block_b",))
def neural_network3_forward(x, w1, b1, w2, b2, w3, b3, *, block_b=2048):
    """x: (B, 106) f32. Weights stored as (in_features, out_features); returns (B, 1) f32."""
    B, in_dim = x.shape
    hid = w1.shape[1]
    out_dim = w3.shape[1]
    assert in_dim == INPUT_DIM and out_dim == OUTPUT_DIM

    bb = _pick_block_b(B, block_b)
    num_tiles = pl.cdiv(B, bb)

    # Tiny per-call reshapes (128 B / 4 B); the heavy pad/cast of x from the previous
    # version is gone entirely.
    w3t = w3.reshape(1, hid)   # (hid, 1) -> (1, hid): layer-3 weights as a row vector
    b3s = b3.reshape(-1)       # (1, 1)   -> (1,): scalar bias, lives in SMEM

    out_t = pl.pallas_call(
        _mlp_kernel,
        out_shape=jax.ShapeDtypeStruct((num_tiles, 1, bb), jnp.float32),
        grid_spec=pl.GridSpec(
            grid=(num_tiles,),
            in_specs=[
                pl.BlockSpec((bb, in_dim), lambda i: (i, 0)),        # x tile (streamed)
                pl.BlockSpec((in_dim, hid), lambda i: (0, 0)),       # W1 (resident)
                pl.BlockSpec((1, hid), lambda i: (0, 0)),            # b1
                pl.BlockSpec((hid, hid), lambda i: (0, 0)),          # W2
                pl.BlockSpec((1, hid), lambda i: (0, 0)),            # b2
                pl.BlockSpec((1, hid), lambda i: (0, 0)),            # W3^T row
                pl.BlockSpec(memory_space=pltpu.MemorySpace.SMEM),   # b3 scalar
            ],
            out_specs=pl.BlockSpec((1, 1, bb), lambda i: (i, 0, 0)),
        ),
        compiler_params=pltpu.CompilerParams(
            dimension_semantics=("parallel",),  # batch axis shards across v7x TensorCores
        ),
    )(x, w1, b1, w2, b2, w3t, b3s)

    # (num_tiles, 1, bb) -> flat batch-major -> (B, 1); drops the ragged-tile tail.
    return out_t.reshape(num_tiles * bb)[:B].reshape(B, out_dim)


def init_params(key, input_dim, hidden_dim, output_dim):
    """Deterministic init mirroring the PyTorch module:
    kaiming_uniform_(relu) for layer_1/layer_2 weights, default Linear init
    (uniform +-1/sqrt(fan_in)) for layer_3 weight and all biases."""
    k1, k2, k3, kb1, kb2, kb3 = jax.random.split(key, 6)

    def kaiming_uniform(k, fan_in, fan_out):
        bound = jnp.sqrt(6.0 / fan_in)  # gain=sqrt(2) for relu => sqrt(2)*sqrt(3/fan_in)
        return jax.random.uniform(k, (fan_in, fan_out), jnp.float32, -bound, bound)

    def default_uniform(k, shape, fan_in):
        bound = 1.0 / jnp.sqrt(fan_in)
        return jax.random.uniform(k, shape, jnp.float32, -bound, bound)

    w1 = kaiming_uniform(k1, input_dim, hidden_dim)
    w2 = kaiming_uniform(k2, hidden_dim, hidden_dim)
    w3 = default_uniform(k3, (hidden_dim, output_dim), hidden_dim)
    b1 = default_uniform(kb1, (1, hidden_dim), input_dim)
    b2 = default_uniform(kb2, (1, hidden_dim), hidden_dim)
    b3 = default_uniform(kb3, (1, output_dim), hidden_dim)
    return w1, b1, w2, b2, w3, b3


def reference_forward(x, w1, b1, w2, b2, w3, b3):
    h1 = jax.nn.relu(x @ w1 + b1)
    h2 = jax.nn.relu(h1 @ w2 + b2)
    return jax.nn.sigmoid(h2 @ w3 + b3)


if __name__ == "__main__":
    key = jax.random.PRNGKey(0)
    kx, kp = jax.random.split(key)

    B = 256
    x = jax.random.normal(kx, (B, INPUT_DIM), dtype=jnp.float32)
    params = init_params(kp, INPUT_DIM, HIDDEN_DIM, OUTPUT_DIM)

    # B=256 -> bb=128, grid=(2,): exercises pipelining / megacore sharding at demo scale.
    out = neural_network3_forward(x, *params)
    out = jax.block_until_ready(out)

    ref = reference_forward(x, *params)
    assert out.shape == (B, OUTPUT_DIM)
    assert jnp.allclose(out, ref, atol=1e-2, rtol=0.0), "mismatch vs JAX reference"

    print("KERNEL_OK")
</pallas_src>

<mosaic_0001>
module attributes {stable_mosaic.version = 11 : i64} {
  func.func @_mlp_kernel(%arg0: i32, %arg1: memref<128x106xf32, #tpu.memory_space<vmem>>, %arg2: memref<106x32xf32, #tpu.memory_space<vmem>>, %arg3: memref<1x32xf32, #tpu.memory_space<vmem>>, %arg4: memref<32x32xf32, #tpu.memory_space<vmem>>, %arg5: memref<1x32xf32, #tpu.memory_space<vmem>>, %arg6: memref<1x32xf32, #tpu.memory_space<vmem>>, %arg7: memref<1xf32, #tpu.memory_space<smem>>, %arg8: memref<1x1x128xf32, #tpu.memory_space<vmem>>) attributes {dimension_semantics = [#tpu.dimension_semantics<parallel>], iteration_bounds = array<i64: 2>, scalar_prefetch = 0 : i64, scratch_operands = 0 : i64, tpu.core_type = #tpu.core_type<tc>, window_params = [{transform_indices = @transform_0, window_bounds = array<i64: 128, 106>}, {pipeline_mode = #tpu.pipeline_mode<synchronous>, transform_indices = @transform_1, window_bounds = array<i64: 106, 32>}, {pipeline_mode = #tpu.pipeline_mode<synchronous>, transform_indices = @transform_2, window_bounds = array<i64: 1, 32>}, {pipeline_mode = #tpu.pipeline_mode<synchronous>, transform_indices = @transform_3, window_bounds = array<i64: 32, 32>}, {pipeline_mode = #tpu.pipeline_mode<synchronous>, transform_indices = @transform_4, window_bounds = array<i64: 1, 32>}, {pipeline_mode = #tpu.pipeline_mode<synchronous>, transform_indices = @transform_5, window_bounds = array<i64: 1, 32>}, {transform_indices = @transform_6, window_bounds = array<i64: 1>}, {transform_indices = @transform_7, window_bounds = array<i64: 1, 1, 128>}]} {
    %c0 = arith.constant 0 : index
    %c0_0 = arith.constant 0 : index
    %0 = vector.load %arg1[%c0, %c0_0] : memref<128x106xf32, #tpu.memory_space<vmem>>, vector<128x106xf32>
    %c0_1 = arith.constant 0 : index
    %c0_2 = arith.constant 0 : index
    %1 = vector.load %arg2[%c0_1, %c0_2] : memref<106x32xf32, #tpu.memory_space<vmem>>, vector<106x32xf32>
    %cst = arith.constant dense<0.000000e+00> : vector<128x32xf32>
    %2 = tpu.matmul %0, %1, %cst {dimension_numbers = #tpu.dot_dimension_numbers<[1], [0], [0], [1], [0, 0, 1, 1], [], []>} : vector<128x106xf32>, vector<106x32xf32>, vector<128x32xf32> -> vector<128x32xf32>
    %c0_3 = arith.constant 0 : index
    %c0_4 = arith.constant 0 : index
    %3 = vector.load %arg3[%c0_3, %c0_4] : memref<1x32xf32, #tpu.memory_space<vmem>>, vector<1x32xf32>
    %4 = vector.broadcast %3 : vector<1x32xf32> to vector<128x32xf32>
    %5 = arith.addf %2, %4 : vector<128x32xf32>
    %cst_5 = arith.constant 0.000000e+00 : f32
    %6 = vector.broadcast %cst_5 : f32 to vector<128x32xf32>
    %7 = arith.maximumf %5, %6 : vector<128x32xf32>
    %c0_6 = arith.constant 0 : index
    %c0_7 = arith.constant 0 : index
    %8 = vector.load %arg4[%c0_6, %c0_7] : memref<32x32xf32, #tpu.memory_space<vmem>>, vector<32x32xf32>
    %cst_8 = arith.constant dense<0.000000e+00> : vector<128x32xf32>
    %9 = tpu.matmul %7, %8, %cst_8 {dimension_numbers = #tpu.dot_dimension_numbers<[1], [0], [0], [1], [0, 0, 1, 1], [], []>} : vector<128x32xf32>, vector<32x32xf32>, vector<128x32xf32> -> vector<128x32xf32>
    %c0_9 = arith.constant 0 : index
    %c0_10 = arith.constant 0 : index
    %10 = vector.load %arg5[%c0_9, %c0_10] : memref<1x32xf32, #tpu.memory_space<vmem>>, vector<1x32xf32>
    %11 = vector.broadcast %10 : vector<1x32xf32> to vector<128x32xf32>
    %12 = arith.addf %9, %11 : vector<128x32xf32>
    %cst_11 = arith.constant 0.000000e+00 : f32
    %13 = vector.broadcast %cst_11 : f32 to vector<128x32xf32>
    %14 = arith.maximumf %12, %13 : vector<128x32xf32>
    %c0_12 = arith.constant 0 : index
    %c0_13 = arith.constant 0 : index
    %15 = vector.load %arg6[%c0_12, %c0_13] : memref<1x32xf32, #tpu.memory_space<vmem>>, vector<1x32xf32>
    %cst_14 = arith.constant dense<0.000000e+00> : vector<1x128xf32>
    %16 = tpu.matmul %15, %14, %cst_14 {dimension_numbers = #tpu.dot_dimension_numbers<[1], [1], [0], [0], [0, 0, 1, 0], [], []>} : vector<1x32xf32>, vector<128x32xf32>, vector<1x128xf32> -> vector<1x128xf32>
    %c0_15 = arith.constant 0 : index
    %17 = memref.load %arg7[%c0_15] : memref<1xf32, #tpu.memory_space<smem>>
    %18 = vector.broadcast %17 : f32 to vector<1x128xf32>
    %19 = arith.addf %16, %18 : vector<1x128xf32>
    %20 = arith.negf %19 : vector<1x128xf32>
    %21 = math.exp %20 : vector<1x128xf32>
    %cst_16 = arith.constant 1.000000e+00 : f32
    %22 = vector.broadcast %cst_16 : f32 to vector<1x128xf32>
    %23 = arith.addf %22, %21 : vector<1x128xf32>
    %24 = arith.divf %22, %23 : vector<1x128xf32>
    %c0_17 = arith.constant 0 : index
    %c0_18 = arith.constant 0 : index
    %c0_19 = arith.constant 0 : index
    %25 = vector.load %arg8[%c0_17, %c0_18, %c0_19] : memref<1x1x128xf32, #tpu.memory_space<vmem>>, vector<1x1x128xf32>
    %26 = vector.shape_cast %25 : vector<1x1x128xf32> to vector<1x128xf32>
    %27 = vector.shape_cast %24 : vector<1x128xf32> to vector<1x1x128xf32>
    tpu.vector_store %arg8[%c0_17, %c0_18, %c0_19], %27 {strides = array<i32>} : memref<1x1x128xf32, #tpu.memory_space<vmem>>, vector<1x1x128xf32>,
    return
  }
  func.func @transform_0(%arg0: i32) -> (i32, i32) {
    %c0_i32 = arith.constant 0 : i32
    %c0_i32_0 = arith.constant 0 : i32
    return %arg0, %c0_i32 : i32, i32
  }
  func.func @transform_1(%arg0: i32) -> (i32, i32) {
    %c0_i32 = arith.constant 0 : i32
    %c0_i32_0 = arith.constant 0 : i32
    %c0_i32_1 = arith.constant 0 : i32
    return %c0_i32, %c0_i32_0 : i32, i32
  }
  func.func @transform_2(%arg0: i32) -> (i32, i32) {
    %c0_i32 = arith.constant 0 : i32
    %c0_i32_0 = arith.constant 0 : i32
    %c0_i32_1 = arith.constant 0 : i32
    return %c0_i32, %c0_i32_0 : i32, i32
  }
  func.func @transform_3(%arg0: i32) -> (i32, i32) {
    %c0_i32 = arith.constant 0 : i32
    %c0_i32_0 = arith.constant 0 : i32
    %c0_i32_1 = arith.constant 0 : i32
    return %c0_i32, %c0_i32_0 : i32, i32
  }
  func.func @transform_4(%arg0: i32) -> (i32, i32) {
    %c0_i32 = arith.constant 0 : i32
    %c0_i32_0 = arith.constant 0 : i32
    %c0_i32_1 = arith.constant 0 : i32
    return %c0_i32, %c0_i32_0 : i32, i32
  }
  func.func @transform_5(%arg0: i32) -> (i32, i32) {
    %c0_i32 = arith.constant 0 : i32
    %c0_i32_0 = arith.constant 0 : i32
    %c0_i32_1 = arith.constant 0 : i32
    return %c0_i32, %c0_i32_0 : i32, i32
  }
  func.func @transform_6(%arg0: i32) -> i32 {
    %c0_i32 = arith.constant 0 : i32
    %c0_i32_0 = arith.constant 0 : i32
    return %c0_i32 : i32
  }
  func.func @transform_7(%arg0: i32) -> (i32, i32, i32) {
    %c0_i32 = arith.constant 0 : i32
    %c0_i32_0 = arith.constant 0 : i32
    %c0_i32_1 = arith.constant 0 : i32
    return %arg0, %c0_i32, %c0_i32_0 : i32, i32, i32
  }
}

</mosaic_0001>

<llo_original>
// kernel: neural_network3_forward.1
$region0: #{neural_network3_forward.1}
  #allocation0 [shape = 'u32[]', space=smem, size = 0x4, offset = 0x4, fixed_abs, tag = 'smem constant byte address 0x4 - core index']
  #allocation1 [shape = 'u32[144,128]{1,0:T(1,128)}', space=vmem, size = 0x12000, scoped, tag = 'internal scratch']
  #allocation2 [shape = 'f32[1]{0:T(128)S(6)}', space=smem, size = 0x200, scoped, tag = 'scoped memory for neural_network3_forward.1']
  %s0 = inlined_call_operand.vmem [shape: f32[256,106], index: 0, kind: input, shape index: {}]
  %s1 = inlined_call_operand.vmem [shape: f32[106,32], index: 1, kind: input, shape index: {}]
  %s2 = inlined_call_operand.vmem [shape: f32[1,32], index: 2, kind: input, shape index: {}]
  %s3 = inlined_call_operand.vmem [shape: f32[32,32], index: 3, kind: input, shape index: {}]
  %s4 = inlined_call_operand.vmem [shape: f32[1,32], index: 4, kind: input, shape index: {}]
  %s5 = inlined_call_operand.vmem [shape: f32[1,32], index: 5, kind: input, shape index: {}]
  %s6 = inlined_call_operand.<no memory space> [shape: f32[1], index: 6, kind: input, shape index: {}]
  %s7 = inlined_call_operand.hbm [shape: f32[2,1,128], index: 7, kind: output, shape index: {}]
  %s8 = sld [smem:[#allocation0]]
  $region61: #{neural_network3_forward.1} parent=0
    _
  %s10 = ssub.s32 1, %s8
  %s11 = scalar_select 0, %s10, %s8
  %12 = sst [smem:[#allocation2]] %s6
  $region1: #{neural_network3_forward.1} parent=0
    #allocation3 [shape = 'u8[1024]{0}', space=vmem, size = 0x400, scoped, tag = 'output window, operand 0']
    #allocation4 [shape = 's32[2]{0}', space=sflag, size = 0x8, scoped, tag = 'scoped memory for neural_network3_forward.1']
    %13 = vsyncpa [#allocation4], 0
    %s14 = scalar_lea.sflag [#allocation4], 1
    %15 = vsyncpa %s14, 0
    loop: start=0, step=1, limit=4
    $region2: #{neural_network3_forward.1} parent=1 // loop_pre_header
      _
    $region3: #{neural_network3_forward.1} parent=1 // loop_header
      %s17 = sphi 0, %s21
      %p18 = scmp.ge.s32.totalorder %s17, 4
      %s27 = sphi 0, %s29
      %s30 = sphi 0, %s27
      %s31 = sphi 0, %s30
      %s47 = sphi 0, %s31
      %s51 = sphi 0, %s51
      %s53 = sphi 0, %s51
      %s54 = sphi 0, %s53
      %s68 = sphi 0, %s54
      %s72 = sphi 0, %s72
      %s74 = sphi 0, %s72
      %s75 = sphi 0, %s74
      %s89 = sphi 0, %s75
      %s93 = sphi 0, %s93
      %s95 = sphi 0, %s93
      %s96 = sphi 0, %s95
      %s110 = sphi 0, %s96
      %s114 = sphi 0, %s114
      %s116 = sphi 0, %s114
      %s117 = sphi 0, %s116
      %s131 = sphi 0, %s117
      %s135 = sphi 0, %s135
      %s137 = sphi 0, %s135
      %s138 = sphi 0, %s137
      %s152 = sphi 0, %s138
      %s156 = sphi 0, %s156
      %s158 = sphi 0, %s156
      %s159 = sphi 0, %s158
      %s173 = sphi 0, %s159
      %s179 = sphi 0, %s181
      %s182 = sphi 0, %s179
      %s183 = sphi 0, %s182
      %s199 = sphi 0, %s183
    $region4: #{neural_network3_forward.1} parent=1 // loop_header_branch
      %20 = sbr.rel (%p18) target = $region8
    $region5: #{neural_network3_forward.1} parent=1 // loop_body
      %s22 = ssub.s32 %s17, 1
      %s23 = ssub.s32 %s17, 2
      %s24 = sadd.s32 %s17, 1
      %s25 = ssub.s32 %s17, %s24
      %p26 = scmp.eq.s32.totalorder %s25, 0
      %s28 = sadd.s32 %s27, 1
      %s29 = scalar_select %p26, %s27, %s28
      %p32 = pneg %p26
      %p33 = scmp.eq.s32.totalorder %s17, 1
      %p34 = por %p32, %p33
      %p35 = scmp.ne.s32.totalorder %s27, %s30
      %p36 = scmp.eq.s32.totalorder %s17, 0
      %p37 = por %p35, %p36
      %p38 = scmp.ne.s32.totalorder %s27, %s30
      %p39 = scmp.eq.s32.totalorder %s22, 1
      %p40 = por %p38, %p39
      %p41 = scmp.ne.s32.totalorder %s30, %s31
      %p42 = scmp.eq.s32.totalorder %s22, 0
      %p43 = por %p41, %p42
      %p44 = scmp.ne.s32.totalorder %s30, %s31
      %p45 = scmp.eq.s32.totalorder %s23, 1
      %p46 = por %p44, %p45
      %p48 = scmp.ne.s32.totalorder %s31, %s47
      %p49 = scmp.eq.s32.totalorder %s23, 0
      %p50 = por %p48, %p49
      %s52 = sadd.s32 %s51, 1
      %p55 = scmp.eq.s32.totalorder %s17, 1
      %p56 = scmp.ne.s32.totalorder %s51, %s53
      %p57 = scmp.eq.s32.totalorder %s17, 0
      %p58 = por %p56, %p57
      %p59 = scmp.ne.s32.totalorder %s51, %s53
      %p60 = scmp.eq.s32.totalorder %s22, 1
      %p61 = por %p59, %p60
      %p62 = scmp.ne.s32.totalorder %s53, %s54
      %p63 = scmp.eq.s32.totalorder %s22, 0
      %p64 = por %p62, %p63
      %p65 = scmp.ne.s32.totalorder %s53, %s54
      %p66 = scmp.eq.s32.totalorder %s23, 1
      %p67 = por %p65, %p66
      %p69 = scmp.ne.s32.totalorder %s54, %s68
      %p70 = scmp.eq.s32.totalorder %s23, 0
      %p71 = por %p69, %p70
      %s73 = sadd.s32 %s72, 1
      %p76 = scmp.eq.s32.totalorder %s17, 1
      %p77 = scmp.ne.s32.totalorder %s72, %s74
      %p78 = scmp.eq.s32.totalorder %s17, 0
      %p79 = por %p77, %p78
      %p80 = scmp.ne.s32.totalorder %s72, %s74
      %p81 = scmp.eq.s32.totalorder %s22, 1
      %p82 = por %p80, %p81
      %p83 = scmp.ne.s32.totalorder %s74, %s75
      %p84 = scmp.eq.s32.totalorder %s22, 0
      %p85 = por %p83, %p84
      %p86 = scmp.ne.s32.totalorder %s74, %s75
      %p87 = scmp.eq.s32.totalorder %s23, 1
      %p88 = por %p86, %p87
      %p90 = scmp.ne.s32.totalorder %s75, %s89
      %p91 = scmp.eq.s32.totalorder %s23, 0
      %p92 = por %p90, %p91
      %s94 = sadd.s32 %s93, 1
      %p97 = scmp.eq.s32.totalorder %s17, 1
      %p98 = scmp.ne.s32.totalorder %s93, %s95
      %p99 = scmp.eq.s32.totalorder %s17, 0
      %p100 = por %p98, %p99
      %p101 = scmp.ne.s32.totalorder %s93, %s95
      %p102 = scmp.eq.s32.totalorder %s22, 1
      %p103 = por %p101, %p102
      %p104 = scmp.ne.s32.totalorder %s95, %s96
      %p105 = scmp.eq.s32.totalorder %s22, 0
      %p106 = por %p104, %p105
      %p107 = scmp.ne.s32.totalorder %s95, %s96
      %p108 = scmp.eq.s32.totalorder %s23, 1
      %p109 = por %p107, %p108
      %p111 = scmp.ne.s32.totalorder %s96, %s110
      %p112 = scmp.eq.s32.totalorder %s23, 0
      %p113 = por %p111, %p112
      %s115 = sadd.s32 %s114, 1
      %p118 = scmp.eq.s32.totalorder %s17, 1
      %p119 = scmp.ne.s32.totalorder %s114, %s116
      %p120 = scmp.eq.s32.totalorder %s17, 0
      %p121 = por %p119, %p120
      %p122 = scmp.ne.s32.totalorder %s114, %s116
      %p123 = scmp.eq.s32.totalorder %s22, 1
      %p124 = por %p122, %p123
      %p125 = scmp.ne.s32.totalorder %s116, %s117
      %p126 = scmp.eq.s32.totalorder %s22, 0
      %p127 = por %p125, %p126
      %p128 = scmp.ne.s32.totalorder %s116, %s117
      %p129 = scmp.eq.s32.totalorder %s23, 1
      %p130 = por %p128, %p129
      %p132 = scmp.ne.s32.totalorder %s117, %s131
      %p133 = scmp.eq.s32.totalorder %s23, 0
      %p134 = por %p132, %p133
      %s136 = sadd.s32 %s135, 1
      %p139 = scmp.eq.s32.totalorder %s17, 1
      %p140 = scmp.ne.s32.totalorder %s135, %s137
      %p141 = scmp.eq.s32.totalorder %s17, 0
      %p142 = por %p140, %p141
      %p143 = scmp.ne.s32.totalorder %s135, %s137
      %p144 = scmp.eq.s32.totalorder %s22, 1
      %p145 = por %p143, %p144
      %p146 = scmp.ne.s32.totalorder %s137, %s138
      %p147 = scmp.eq.s32.totalorder %s22, 0
      %p148 = por %p146, %p147
      %p149 = scmp.ne.s32.totalorder %s137, %s138
      %p150 = scmp.eq.s32.totalorder %s23, 1
      %p151 = por %p149, %p150
      %p153 = scmp.ne.s32.totalorder %s138, %s152
      %p154 = scmp.eq.s32.totalorder %s23, 0
      %p155 = por %p153, %p154
      %s157 = sadd.s32 %s156, 1
      %p160 = scmp.eq.s32.totalorder %s17, 1
      %p161 = scmp.ne.s32.totalorder %s156, %s158
      %p162 = scmp.eq.s32.totalorder %s17, 0
      %p163 = por %p161, %p162
      %p164 = scmp.ne.s32.totalorder %s156, %s158
      %p165 = scmp.eq.s32.totalorder %s22, 1
      %p166 = por %p164, %p165
      %p167 = scmp.ne.s32.totalorder %s158, %s159
      %p168 = scmp.eq.s32.totalorder %s22, 0
      %p169 = por %p167, %p168
      %p170 = scmp.ne.s32.totalorder %s158, %s159
      %p171 = scmp.eq.s32.totalorder %s23, 1
      %p172 = por %p170, %p171
      %p174 = scmp.ne.s32.totalorder %s159, %s173
      %p175 = scmp.eq.s32.totalorder %s23, 0
      %p176 = por %p174, %p175
      %s177 = ssub.s32 %s17, %s24
      %p178 = scmp.eq.s32.totalorder %s177, 0
      %s180 = sadd.s32 %s179, 1
      %s181 = scalar_select %p178, %s179, %s180
      %p184 = pneg %p178
      %p185 = scmp.eq.s32.totalorder %s17, 1
      %p186 = por %p184, %p185
      %p187 = scmp.ne.s32.totalorder %s179, %s182
      %p188 = scmp.eq.s32.totalorder %s17, 0
      %p189 = por %p187, %p188
      %p190 = scmp.ne.s32.totalorder %s179, %s182
      %p191 = scmp.eq.s32.totalorder %s22, 1
      %p192 = por %p190, %p191
      %p193 = scmp.ne.s32.totalorder %s182, %s183
      %p194 = scmp.eq.s32.totalorder %s22, 0
      %p195 = por %p193, %p194
      %p196 = scmp.ne.s32.totalorder %s182, %s183
      %p197 = scmp.eq.s32.totalorder %s23, 1
      %p198 = por %p196, %p197
      %p200 = scmp.ne.s32.totalorder %s183, %s199
      %p201 = scmp.eq.s32.totalorder %s23, 0
      %p202 = por %p200, %p201
      %p203 = scmp.le.s32.totalorder 1, %s17
      %p204 = scmp.lt.s32.totalorder %s17, 3
      %p205 = pnand %p203, %p204
      %p206 = pneg %p205
      // Predicated region
      $region9: #{neural_network3_forward.1} parent=5 // pred_check
        _
      $region10: #{neural_network3_forward.1} parent=5 // pred_check_branch
        %208 = sbr.rel (%p205) target = $region12
      $region11: #{neural_network3_forward.1} parent=5 // pred_region
        %s209 = ssub.s32 %s17, 1
        // Predicated region
        $region13: #{neural_network3_forward.1} parent=11 // pred_check
          %p210 = pneg %p64
        $region14: #{neural_network3_forward.1} parent=11 // pred_check_branch
          %212 = sbr.rel (%p210) target = $region16
        $region15: #{neural_network3_forward.1} parent=11 // pred_region
          _
        $region16: #{neural_network3_forward.1} parent=11 // pred_fallthru
          _
        // Predicated region
        $region17: #{neural_network3_forward.1} parent=11 // pred_check
          %p213 = pneg %p85
        $region18: #{neural_network3_forward.1} parent=11 // pred_check_branch
          %215 = sbr.rel (%p213) target = $region20
        $region19: #{neural_network3_forward.1} parent=11 // pred_region
          _
        $region20: #{neural_network3_forward.1} parent=11 // pred_fallthru
          _
        // Predicated region
        $region21: #{neural_network3_forward.1} parent=11 // pred_check
          %p216 = pneg %p106
        $region22: #{neural_network3_forward.1} parent=11 // pred_check_branch
          %218 = sbr.rel (%p216) target = $region24
        $region23: #{neural_network3_forward.1} parent=11 // pred_region
          _
        $region24: #{neural_network3_forward.1} parent=11 // pred_fallthru
          _
        // Predicated region
        $region25: #{neural_network3_forward.1} parent=11 // pred_check
          %p219 = pneg %p127
        $region26: #{neural_network3_forward.1} parent=11 // pred_check_branch
          %221 = sbr.rel (%p219) target = $region28
        $region27: #{neural_network3_forward.1} parent=11 // pred_region
          _
        $region28: #{neural_network3_forward.1} parent=11 // pred_fallthru
          _
        // Predicated region
        $region29: #{neural_network3_forward.1} parent=11 // pred_check
          %p222 = pneg %p148
        $region30: #{neural_network3_forward.1} parent=11 // pred_check_branch
          %224 = sbr.rel (%p222) target = $region32
        $region31: #{neural_network3_forward.1} parent=11 // pred_region
          _
        $region32: #{neural_network3_forward.1} parent=11 // pred_fallthru
          _
        // Predicated region
        $region33: #{neural_network3_forward.1} parent=11 // pred_check
          %p225 = pneg %p169
        $region34: #{neural_network3_forward.1} parent=11 // pred_check_branch
          %227 = sbr.rel (%p225) target = $region36
        $region35: #{neural_network3_forward.1} parent=11 // pred_region
          _
        $region36: #{neural_network3_forward.1} parent=11 // pred_fallthru
          _
      $region12: #{neural_network3_forward.1} parent=5 // pred_fallthru
        _
      %p228 = scmp.lt.s32.totalorder %s17, 2
      // Predicated region
      $region37: #{neural_network3_forward.1} parent=5 // pred_check
        %p229 = pneg %p228
      $region38: #{neural_network3_forward.1} parent=5 // pred_check_branch
        %231 = sbr.rel (%p229) target = $region40
      $region39: #{neural_network3_forward.1} parent=5 // pred_region
        // Predicated region
        $region41: #{neural_network3_forward.1} parent=39 // pred_check
          %p232 = pneg %p37
        $region42: #{neural_network3_forward.1} parent=39 // pred_check_branch
          %234 = sbr.rel (%p232) target = $region44
        $region43: #{neural_network3_forward.1} parent=39 // pred_region
          %s235 = smul.u32 16, %s17
          %p236 = scmp.lt.s32.totalorder %s235, 31
          %s237 = scalar_select %p236, %s235, 31
          %s238 = smul.addr %s237, 8
          %s239 = scalar_lea.vmem %s0, %s238
          %s240 = smul.u32 16, %s17
        $region44: #{neural_network3_forward.1} parent=39 // pred_fallthru
          _
      $region40: #{neural_network3_forward.1} parent=5 // pred_fallthru
        _
      %p241 = scmp.le.s32.totalorder 1, %s17
      %p242 = scmp.lt.s32.totalorder %s17, 3
      %p243 = pnand %p241, %p242
      %p244 = pneg %p243
      // Predicated region
      $region45: #{neural_network3_forward.1} parent=5 // pred_check
        _
      $region46: #{neural_network3_forward.1} parent=5 // pred_check_branch
        %246 = sbr.rel (%p243) target = $region48
      $region47: #{neural_network3_forward.1} parent=5 // pred_region
        %s247 = ssub.s32 %s17, 1
        %s248 = smul.u32 16, %s22
        %p249 = scmp.lt.s32.totalorder %s248, 31
        %s250 = scalar_select %p249, %s248, 31
        %s251 = smul.addr %s250, 8
        %s252 = scalar_lea.vmem %s0, %s251
        %p253 = pneg %p43
        %p254 = pneg %p40
        %p255 = pneg %p64
        %p256 = pneg %p61
        %p257 = pneg %p85
        %p258 = pneg %p82
        %p259 = pneg %p106
        %p260 = pneg %p103
        %p261 = pneg %p127
        %p262 = pneg %p124
        %p263 = pneg %p148
        %p264 = pneg %p145
        %p265 = pneg %p169
        %p266 = pneg %p166
        %p267 = pneg %p195
        %p268 = pneg %p192
        %s269 = sand.u32 %s182, 1
        %s270 = scalar_lea.sflag [#allocation4], %s269
        %s271 = sand.u32 %s182, 1
        %s272 = scalar_lea.vmem [#allocation3], %s271
        %s273 = smul.u32 16, %s22
        %p274 = scmp.lt.s32.totalorder %s273, 31
        %s275 = scalar_select %p274, %s273, 31
        %s276 = smul.addr %s275, 8
        %s277 = scalar_lea.vmem %s0, %s276
        %s278 = smul.u32 16, %s22
        %v279 = vld [vmem:[%s277] sm:$0xff]
        %v280 = vld [vmem:[%s277 + $0x8] sm:$0xff]
        %v281 = vld [vmem:[%s277 + $0x10] sm:$0xff]
        %v282 = vld [vmem:[%s277 + $0x18] sm:$0xff]
        %v283 = vld [vmem:[%s277 + $0x20] sm:$0xff]
        %v284 = vld [vmem:[%s277 + $0x28] sm:$0xff]
        %v285 = vld [vmem:[%s277 + $0x30] sm:$0xff]
        %v286 = vld [vmem:[%s277 + $0x38] sm:$0xff]
        %v287 = vld [vmem:[%s277 + $0x40] sm:$0xff]
        %v288 = vld [vmem:[%s277 + $0x48] sm:$0xff]
        %v289 = vld [vmem:[%s277 + $0x50] sm:$0xff]
        %v290 = vld [vmem:[%s277 + $0x58] sm:$0xff]
        %v291 = vld [vmem:[%s277 + $0x60] sm:$0xff]
        %v292 = vld [vmem:[%s277 + $0x68] sm:$0xff]
        %v293 = vld [vmem:[%s277 + $0x70] sm:$0xff]
        %v294 = vld [vmem:[%s277 + $0x78] sm:$0xff]
        %v295 = vld [vmem:[%s1] sm:$0xff]
        %v296 = vld [vmem:[%s1 + $0x8] sm:$0xff]
        %v297 = vld [vmem:[%s1 + $0x10] sm:$0xff]
        %v298 = vld [vmem:[%s1 + $0x18] sm:$0xff]
        %v299 = vld [vmem:[%s1 + $0x20] sm:$0xff]
        %v300 = vld [vmem:[%s1 + $0x28] sm:$0xff]
        %v301 = vld [vmem:[%s1 + $0x30] sm:$0xff]
        %v302 = vld [vmem:[%s1 + $0x38] sm:$0xff]
        %v303 = vld [vmem:[%s1 + $0x40] sm:$0xff]
        %v304 = vld [vmem:[%s1 + $0x48] sm:$0xff]
        %v305 = vld [vmem:[%s1 + $0x50] sm:$0xff]
        %v306 = vld [vmem:[%s1 + $0x58] sm:$0xff]
        %v307 = vld [vmem:[%s1 + $0x60] sm:$0xff]
        %v308 = vld [vmem:[%s1 + $0x68] sm:$0x3]
        %v309 = vld [vmem:[%s2] sm:$0x1]
        %v311 = vlaneseq
        %v312 = vshrl.u32 %v311, 7
        %v313 = vsub.s32 0, %v312
        %v314 = vrot.slane %v309, %v313
        %vm316 = vcmask 867328
        %v318 = vsel %vm316, %v279, 0
        %v321 = vsel %vm316, %v280, 0
        %v324 = vsel %vm316, %v281, 0
        %v327 = vsel %vm316, %v282, 0
        %v330 = vsel %vm316, %v283, 0
        %v333 = vsel %vm316, %v284, 0
        %v336 = vsel %vm316, %v285, 0
        %v339 = vsel %vm316, %v286, 0
        %v342 = vsel %vm316, %v287, 0
        %v345 = vsel %vm316, %v288, 0
        %v348 = vsel %vm316, %v289, 0
        %v351 = vsel %vm316, %v290, 0
        %v354 = vsel %vm316, %v291, 0
        %v357 = vsel %vm316, %v292, 0
        %v360 = vsel %vm316, %v293, 0
        %v363 = vsel %vm316, %v294, 0
        %vm365 = vcmask 1041408
        %v367 = vsel %vm365, %v308, 0
        %369 = vmatprep.subr.mxu0 0.0
        %370 = vmatpush1.msra.mxu0 %v295
        %371 = vmatprep.subr.mxu0 0.0
        %372 = vmatpush1.msra.mxu0 %v296
        %373 = vmatprep.subr.mxu0 0.0
        %374 = vmatpush1.msra.mxu0 %v297
        %375 = vmatprep.subr.mxu0 0.0
        %376 = vmatpush1.msra.mxu0 %v298
        %377 = vmatprep.subr.mxu0 0.0
        %378 = vmatpush1.msra.mxu0 %v299
        %379 = vmatprep.subr.mxu0 0.0
        %380 = vmatpush1.msra.mxu0 %v300
        %381 = vmatprep.subr.mxu0 0.0
        %382 = vmatpush1.msra.mxu0 %v301
        %383 = vmatprep.subr.mxu0 0.0
        %384 = vmatpush1.msra.mxu0 %v302
        %385 = vmatprep.subr.mxu0 0.0
        %386 = vmatpush1.msra.mxu0 %v303
        %387 = vmatprep.subr.mxu0 0.0
        %388 = vmatpush1.msra.mxu0 %v304
        %389 = vmatprep.subr.mxu0 0.0
        %390 = vmatpush1.msra.mxu0 %v305
        %391 = vmatprep.subr.mxu0 0.0
        %392 = vmatpush1.msra.mxu0 %v306
        %393 = vmatprep.subr.mxu0 0.0
        %394 = vmatpush1.msra.mxu0 %v307
        %395 = vmatprep.subr.mxu0 0.0
        %396 = vmatpush1.msra.mxu0 %v367
        %397 = vmatprep.subr.mxu0 0.0
        %398 = vmatpush1.msra.mxu0 0.0
        %399 = vmatprep.subr.mxu0 0.0
        %400 = vmatpush1.msra.mxu0 0.0
        %401 = vmatprep.subr.mxu0 0.0
        %402 = vmatpush1.msra.mxu0 0.0
        %403 = vmatprep.subr.mxu0 0.0
        %404 = vmatpush1.msra.mxu0 0.0
        %405 = vmatprep.subr.mxu0 0.0
        %406 = vmatpush1.msra.mxu0 0.0
        %407 = vmatprep.subr.mxu0 0.0
        %408 = vmatpush1.msra.mxu0 0.0
        %409 = vmatprep.subr.mxu0 0.0
        %410 = vmatpush1.msra.mxu0 0.0
        %411 = vmatprep.subr.mxu0 0.0
        %412 = vmatpush1.msra.mxu0 0.0
        %413 = vmatprep.subr.mxu0 0.0
        %414 = vmatpush1.msra.mxu0 0.0
        %415 = vmatprep.subr.mxu0 0.0
        %416 = vmatpush1.msra.mxu0 0.0
        %417 = vmatprep.subr.mxu0 0.0
        %418 = vmatpush1.msra.mxu0 0.0
        %419 = vmatprep.subr.mxu0 0.0
        %420 = vmatpush1.msra.mxu0 0.0
        %421 = vmatprep.subr.mxu0 0.0
        %422 = vmatpush1.msra.mxu0 0.0
        %423 = vmatprep.subr.mxu0 0.0
        %424 = vmatpush1.msra.mxu0 0.0
        %425 = vmatprep.subr.mxu0 0.0
        %426 = vmatpush1.msra.mxu0 0.0
        %427 = vmatprep.subr.mxu0 0.0
        %428 = vmatpush1.msra.mxu0 0.0
        %429 = vmatprep.subr.mxu0 0.0
        %430 = vmatpush1.msra.mxu0 0.0
        %431 = vmatprep.subr.mxu0 0.0
        %432 = vmatpush1.msra.mxu0 0.0
        %433 = vmatprep.mubr.f32.mxu0 0.0
        %434 = vmatmul.mubr.f32.gmra.mrb[0].mxu0 %v318
        %v435 = vpop.f32.mrb[0].mxu0
        %v436 = vadd.f32 %v314, %v435
        %v437 = vpop.f32.mrb[0].mxu0
        %438 = vmatprep.mubr.f32.mxu0 0.0
        %439 = vmatmul.mubr.f32.gmra.mrb[0].mxu0 %v321
        %v440 = vpop.f32.mrb[0].mxu0
        %v441 = vadd.f32 %v314, %v440
        %v442 = vpop.f32.mrb[0].mxu0
        %443 = vmatprep.mubr.f32.mxu0 0.0
        %444 = vmatmul.mubr.f32.gmra.mrb[0].mxu0 %v324
        %v445 = vpop.f32.mrb[0].mxu0
        %v446 = vadd.f32 %v314, %v445
        %v447 = vpop.f32.mrb[0].mxu0
        %448 = vmatprep.mubr.f32.mxu0 0.0
        %449 = vmatmul.mubr.f32.gmra.mrb[0].mxu0 %v327
        %v450 = vpop.f32.mrb[0].mxu0
        %v451 = vadd.f32 %v314, %v450
        %v452 = vpop.f32.mrb[0].mxu0
        %453 = vmatprep.mubr.f32.mxu0 0.0
        %454 = vmatmul.mubr.f32.gmra.mrb[0].mxu0 %v330
        %v455 = vpop.f32.mrb[0].mxu0
        %v456 = vadd.f32 %v314, %v455
        %v457 = vpop.f32.mrb[0].mxu0
        %458 = vmatprep.mubr.f32.mxu0 0.0
        %459 = vmatmul.mubr.f32.gmra.mrb[0].mxu0 %v333
        %v460 = vpop.f32.mrb[0].mxu0
        %v461 = vadd.f32 %v314, %v460
        %v462 = vpop.f32.mrb[0].mxu0
        %463 = vmatprep.mubr.f32.mxu0 0.0
        %464 = vmatmul.mubr.f32.gmra.mrb[0].mxu0 %v336
        %v465 = vpop.f32.mrb[0].mxu0
        %v466 = vadd.f32 %v314, %v465
        %v467 = vpop.f32.mrb[0].mxu0
        %468 = vmatprep.mubr.f32.mxu0 0.0
        %469 = vmatmul.mubr.f32.gmra.mrb[0].mxu0 %v339
        %v470 = vpop.f32.mrb[0].mxu0
        %v471 = vadd.f32 %v314, %v470
        %v472 = vpop.f32.mrb[0].mxu0
        %473 = vmatprep.mubr.f32.mxu0 0.0
        %474 = vmatmul.mubr.f32.gmra.mrb[0].mxu0 %v342
        %v475 = vpop.f32.mrb[0].mxu0
        %v476 = vadd.f32 %v314, %v475
        %v477 = vpop.f32.mrb[0].mxu0
        %478 = vmatprep.mubr.f32.mxu0 0.0
        %479 = vmatmul.mubr.f32.gmra.mrb[0].mxu0 %v345
        %v480 = vpop.f32.mrb[0].mxu0
        %v481 = vadd.f32 %v314, %v480
        %v482 = vpop.f32.mrb[0].mxu0
        %483 = vmatprep.mubr.f32.mxu0 0.0
        %484 = vmatmul.mubr.f32.gmra.mrb[0].mxu0 %v348
        %v485 = vpop.f32.mrb[0].mxu0
        %v486 = vadd.f32 %v314, %v485
        %v487 = vpop.f32.mrb[0].mxu0
        %488 = vmatprep.mubr.f32.mxu0 0.0
        %489 = vmatmul.mubr.f32.gmra.mrb[0].mxu0 %v351
        %v490 = vpop.f32.mrb[0].mxu0
        %v491 = vadd.f32 %v314, %v490
        %v492 = vpop.f32.mrb[0].mxu0
        %493 = vmatprep.mubr.f32.mxu0 0.0
        %494 = vmatmul.mubr.f32.gmra.mrb[0].mxu0 %v354
        %v495 = vpop.f32.mrb[0].mxu0
        %v496 = vadd.f32 %v314, %v495
        %v497 = vpop.f32.mrb[0].mxu0
        %498 = vmatprep.mubr.f32.mxu0 0.0
        %499 = vmatmul.mubr.f32.gmra.mrb[0].mxu0 %v357
        %v500 = vpop.f32.mrb[0].mxu0
        %v501 = vadd.f32 %v314, %v500
        %v502 = vpop.f32.mrb[0].mxu0
        %503 = vmatprep.mubr.f32.mxu0 0.0
        %504 = vmatmul.mubr.f32.gmra.mrb[0].mxu0 %v360
        %v505 = vpop.f32.mrb[0].mxu0
        %v506 = vadd.f32 %v314, %v505
        %v507 = vpop.f32.mrb[0].mxu0
        %508 = vmatprep.mubr.f32.mxu0 0.0
        %509 = vmatmul.mubr.f32.gmra.mrb[0].mxu0 %v363
        %v510 = vpop.f32.mrb[0].mxu0
        %v511 = vadd.f32 %v314, %v510
        %v512 = vpop.f32.mrb[0].mxu0
        %513 = vdwg.mxu0
        %v514 = vmax.f32 %v436, 0.0
        %v515 = vmax.f32 %v441, 0.0
        %v516 = vmax.f32 %v446, 0.0
        %v517 = vmax.f32 %v451, 0.0
        %v518 = vmax.f32 %v456, 0.0
        %v519 = vmax.f32 %v461, 0.0
        %v520 = vmax.f32 %v466, 0.0
        %v521 = vmax.f32 %v471, 0.0
        %v522 = vmax.f32 %v476, 0.0
        %v523 = vmax.f32 %v481, 0.0
        %v524 = vmax.f32 %v486, 0.0
        %v525 = vmax.f32 %v491, 0.0
        %v526 = vmax.f32 %v496, 0.0
        %v527 = vmax.f32 %v501, 0.0
        %v528 = vmax.f32 %v506, 0.0
        %v529 = vmax.f32 %v511, 0.0
        %v530 = vld [vmem:[%s3] sm:$0xff]
        %v531 = vld [vmem:[%s3 + $0x8] sm:$0xff]
        %v532 = vld [vmem:[%s3 + $0x10] sm:$0xff]
        %v533 = vld [vmem:[%s3 + $0x18] sm:$0xff]
        %v534 = vld [vmem:[%s4] sm:$0x1]
        %v536 = vlaneseq
        %v537 = vshrl.u32 %v536, 7
        %v538 = vsub.s32 0, %v537
        %v539 = vrot.slane %v534, %v538
        %vm541 = vcmask 261120
        %v543 = vsel %vm541, %v514, 0
        %v546 = vsel %vm541, %v515, 0
        %v549 = vsel %vm541, %v516, 0
        %v552 = vsel %vm541, %v517, 0
        %v555 = vsel %vm541, %v518, 0
        %v558 = vsel %vm541, %v519, 0
        %v561 = vsel %vm541, %v520, 0
        %v564 = vsel %vm541, %v521, 0
        %v567 = vsel %vm541, %v522, 0
        %v570 = vsel %vm541, %v523, 0
        %v573 = vsel %vm541, %v524, 0
        %v576 = vsel %vm541, %v525, 0
        %v579 = vsel %vm541, %v526, 0
        %v582 = vsel %vm541, %v527, 0
        %v585 = vsel %vm541, %v528, 0
        %v588 = vsel %vm541, %v529, 0
        %590 = vmatprep.subr.mxu0 0.0
        %591 = vmatpush1.msra.mxu0 %v530
        %592 = vmatprep.subr.mxu0 0.0
        %593 = vmatpush1.msra.mxu0 %v531
        %594 = vmatprep.subr.mxu0 0.0
        %595 = vmatpush1.msra.mxu0 %v532
        %596 = vmatprep.subr.mxu0 0.0
        %597 = vmatpush1.msra.mxu0 %v533
        %598 = vmatprep.subr.mxu0 0.0
        %599 = vmatpush1.msra.mxu0 0.0
        %600 = vmatprep.subr.mxu0 0.0
        %601 = vmatpush1.msra.mxu0 0.0
        %602 = vmatprep.subr.mxu0 0.0
        %603 = vmatpush1.msra.mxu0 0.0
        %604 = vmatprep.subr.mxu0 0.0
        %605 = vmatpush1.msra.mxu0 0.0
        %606 = vmatprep.subr.mxu0 0.0
        %607 = vmatpush1.msra.mxu0 0.0
        %608 = vmatprep.subr.mxu0 0.0
        %609 = vmatpush1.msra.mxu0 0.0
        %610 = vmatprep.subr.mxu0 0.0
        %611 = vmatpush1.msra.mxu0 0.0
        %612 = vmatprep.subr.mxu0 0.0
        %613 = vmatpush1.msra.mxu0 0.0
        %614 = vmatprep.subr.mxu0 0.0
        %615 = vmatpush1.msra.mxu0 0.0
        %616 = vmatprep.subr.mxu0 0.0
        %617 = vmatpush1.msra.mxu0 0.0
        %618 = vmatprep.subr.mxu0 0.0
        %619 = vmatpush1.msra.mxu0 0.0
        %620 = vmatprep.subr.mxu0 0.0
        %621 = vmatpush1.msra.mxu0 0.0
        %622 = vmatprep.subr.mxu0 0.0
        %623 = vmatpush1.msra.mxu0 0.0
        %624 = vmatprep.subr.mxu0 0.0
        %625 = vmatpush1.msra.mxu0 0.0
        %626 = vmatprep.subr.mxu0 0.0
        %627 = vmatpush1.msra.mxu0 0.0
        %628 = vmatprep.subr.mxu0 0.0
        %629 = vmatpush1.msra.mxu0 0.0
        %630 = vmatprep.subr.mxu0 0.0
        %631 = vmatpush1.msra.mxu0 0.0
        %632 = vmatprep.subr.mxu0 0.0
        %633 = vmatpush1.msra.mxu0 0.0
        %634 = vmatprep.subr.mxu0 0.0
        %635 = vmatpush1.msra.mxu0 0.0
        %636 = vmatprep.subr.mxu0 0.0
        %637 = vmatpush1.msra.mxu0 0.0
        %638 = vmatprep.subr.mxu0 0.0
        %639 = vmatpush1.msra.mxu0 0.0
        %640 = vmatprep.subr.mxu0 0.0
        %641 = vmatpush1.msra.mxu0 0.0
        %642 = vmatprep.subr.mxu0 0.0
        %643 = vmatpush1.msra.mxu0 0.0
        %644 = vmatprep.subr.mxu0 0.0
        %645 = vmatpush1.msra.mxu0 0.0
        %646 = vmatprep.subr.mxu0 0.0
        %647 = vmatpush1.msra.mxu0 0.0
        %648 = vmatprep.subr.mxu0 0.0
        %649 = vmatpush1.msra.mxu0 0.0
        %650 = vmatprep.subr.mxu0 0.0
        %651 = vmatpush1.msra.mxu0 0.0
        %652 = vmatprep.subr.mxu0 0.0
        %653 = vmatpush1.msra.mxu0 0.0
        %654 = vmatprep.mubr.f32.mxu0 0.0
        %655 = vmatmul.mubr.f32.gmra.mrb[0].mxu0 %v543
        %v656 = vpop.f32.mrb[0].mxu0
        %v657 = vadd.f32 %v539, %v656
        %v658 = vpop.f32.mrb[0].mxu0
        %659 = vmatprep.mubr.f32.mxu0 0.0
        %660 = vmatmul.mubr.f32.gmra.mrb[0].mxu0 %v546
        %v661 = vpop.f32.mrb[0].mxu0
        %v662 = vadd.f32 %v539, %v661
        %v663 = vpop.f32.mrb[0].mxu0
        %664 = vmatprep.mubr.f32.mxu0 0.0
        %665 = vmatmul.mubr.f32.gmra.mrb[0].mxu0 %v549
        %v666 = vpop.f32.mrb[0].mxu0
        %v667 = vadd.f32 %v539, %v666
        %v668 = vpop.f32.mrb[0].mxu0
        %669 = vmatprep.mubr.f32.mxu0 0.0
        %670 = vmatmul.mubr.f32.gmra.mrb[0].mxu0 %v552
        %v671 = vpop.f32.mrb[0].mxu0
        %v672 = vadd.f32 %v539, %v671
        %v673 = vpop.f32.mrb[0].mxu0
        %674 = vmatprep.mubr.f32.mxu0 0.0
        %675 = vmatmul.mubr.f32.gmra.mrb[0].mxu0 %v555
        %v676 = vpop.f32.mrb[0].mxu0
        %v677 = vadd.f32 %v539, %v676
        %v678 = vpop.f32.mrb[0].mxu0
        %679 = vmatprep.mubr.f32.mxu0 0.0
        %680 = vmatmul.mubr.f32.gmra.mrb[0].mxu0 %v558
        %v681 = vpop.f32.mrb[0].mxu0
        %v682 = vadd.f32 %v539, %v681
        %v683 = vpop.f32.mrb[0].mxu0
        %684 = vmatprep.mubr.f32.mxu0 0.0
        %685 = vmatmul.mubr.f32.gmra.mrb[0].mxu0 %v561
        %v686 = vpop.f32.mrb[0].mxu0
        %v687 = vadd.f32 %v539, %v686
        %v688 = vpop.f32.mrb[0].mxu0
        %689 = vmatprep.mubr.f32.mxu0 0.0
        %690 = vmatmul.mubr.f32.gmra.mrb[0].mxu0 %v564
        %v691 = vpop.f32.mrb[0].mxu0
        %v692 = vadd.f32 %v539, %v691
        %v693 = vpop.f32.mrb[0].mxu0
        %694 = vmatprep.mubr.f32.mxu0 0.0
        %695 = vmatmul.mubr.f32.gmra.mrb[0].mxu0 %v567
        %v696 = vpop.f32.mrb[0].mxu0
        %v697 = vadd.f32 %v539, %v696
        %v698 = vpop.f32.mrb[0].mxu0
        %699 = vmatprep.mubr.f32.mxu0 0.0
        %700 = vmatmul.mubr.f32.gmra.mrb[0].mxu0 %v570
        %v701 = vpop.f32.mrb[0].mxu0
        %v702 = vadd.f32 %v539, %v701
        %v703 = vpop.f32.mrb[0].mxu0
        %704 = vmatprep.mubr.f32.mxu0 0.0
        %705 = vmatmul.mubr.f32.gmra.mrb[0].mxu0 %v573
        %v706 = vpop.f32.mrb[0].mxu0
        %v707 = vadd.f32 %v539, %v706
        %v708 = vpop.f32.mrb[0].mxu0
        %709 = vmatprep.mubr.f32.mxu0 0.0
        %710 = vmatmul.mubr.f32.gmra.mrb[0].mxu0 %v576
        %v711 = vpop.f32.mrb[0].mxu0
        %v712 = vadd.f32 %v539, %v711
        %v713 = vpop.f32.mrb[0].mxu0
        %714 = vmatprep.mubr.f32.mxu0 0.0
        %715 = vmatmul.mubr.f32.gmra.mrb[0].mxu0 %v579
        %v716 = vpop.f32.mrb[0].mxu0
        %v717 = vadd.f32 %v539, %v716
        %v718 = vpop.f32.mrb[0].mxu0
        %719 = vmatprep.mubr.f32.mxu0 0.0
        %720 = vmatmul.mubr.f32.gmra.mrb[0].mxu0 %v582
        %v721 = vpop.f32.mrb[0].mxu0
        %v722 = vadd.f32 %v539, %v721
        %v723 = vpop.f32.mrb[0].mxu0
        %724 = vmatprep.mubr.f32.mxu0 0.0
        %725 = vmatmul.mubr.f32.gmra.mrb[0].mxu0 %v585
        %v726 = vpop.f32.mrb[0].mxu0
        %v727 = vadd.f32 %v539, %v726
        %v728 = vpop.f32.mrb[0].mxu0
        %729 = vmatprep.mubr.f32.mxu0 0.0
        %730 = vmatmul.mubr.f32.gmra.mrb[0].mxu0 %v588
        %v731 = vpop.f32.mrb[0].mxu0
        %v732 = vadd.f32 %v539, %v731
        %v733 = vpop.f32.mrb[0].mxu0
        %734 = vdwg.mxu0
        %v735 = vmax.f32 %v657, 0.0
        %v736 = vmax.f32 %v662, 0.0
        %v737 = vmax.f32 %v667, 0.0
        %v738 = vmax.f32 %v672, 0.0
        %v739 = vmax.f32 %v677, 0.0
        %v740 = vmax.f32 %v682, 0.0
        %v741 = vmax.f32 %v687, 0.0
        %v742 = vmax.f32 %v692, 0.0
        %v743 = vmax.f32 %v697, 0.0
        %v744 = vmax.f32 %v702, 0.0
        %v745 = vmax.f32 %v707, 0.0
        %v746 = vmax.f32 %v712, 0.0
        %v747 = vmax.f32 %v717, 0.0
        %v748 = vmax.f32 %v722, 0.0
        %v749 = vmax.f32 %v727, 0.0
        %v750 = vmax.f32 %v732, 0.0
        %v751 = vld [vmem:[%s5] sm:$0x1]
        %s752 = sld [smem:[#allocation2]]
        %v753 = vstv %s752
        %v755 = vsel %vm541, %v751, 0
        %v758 = vsel %vm541, %v735, 0
        %v761 = vsel %vm541, %v736, 0
        %v764 = vsel %vm541, %v737, 0
        %v767 = vsel %vm541, %v738, 0
        %v770 = vsel %vm541, %v739, 0
        %v773 = vsel %vm541, %v740, 0
        %v776 = vsel %vm541, %v741, 0
        %v779 = vsel %vm541, %v742, 0
        %v782 = vsel %vm541, %v743, 0
        %v785 = vsel %vm541, %v744, 0
        %v788 = vsel %vm541, %v745, 0
        %v791 = vsel %vm541, %v746, 0
        %v794 = vsel %vm541, %v747, 0
        %v797 = vsel %vm541, %v748, 0
        %v800 = vsel %vm541, %v749, 0
        %v803 = vsel %vm541, %v750, 0
        %805 = vmatprep.subr.mxu0 0.0
        %806 = vmatpush1.xpose.msra.mxu0 %v758
        %807 = vmatprep.subr.mxu0 0.0
        %808 = vmatpush1.xpose.msra.mxu0 %v761
        %809 = vmatprep.subr.mxu0 0.0
        %810 = vmatpush1.xpose.msra.mxu0 %v764
        %811 = vmatprep.subr.mxu0 0.0
        %812 = vmatpush1.xpose.msra.mxu0 %v767
        %813 = vmatprep.subr.mxu0 0.0
        %814 = vmatpush1.xpose.msra.mxu0 %v770
        %815 = vmatprep.subr.mxu0 0.0
        %816 = vmatpush1.xpose.msra.mxu0 %v773
        %817 = vmatprep.subr.mxu0 0.0
        %818 = vmatpush1.xpose.msra.mxu0 %v776
        %819 = vmatprep.subr.mxu0 0.0
        %820 = vmatpush1.xpose.msra.mxu0 %v779
        %821 = vmatprep.subr.mxu0 0.0
        %822 = vmatpush1.xpose.msra.mxu0 %v782
        %823 = vmatprep.subr.mxu0 0.0
        %824 = vmatpush1.xpose.msra.mxu0 %v785
        %825 = vmatprep.subr.mxu0 0.0
        %826 = vmatpush1.xpose.msra.mxu0 %v788
        %827 = vmatprep.subr.mxu0 0.0
        %828 = vmatpush1.xpose.msra.mxu0 %v791
        %829 = vmatprep.subr.mxu0 0.0
        %830 = vmatpush1.xpose.msra.mxu0 %v794
        %831 = vmatprep.subr.mxu0 0.0
        %832 = vmatpush1.xpose.msra.mxu0 %v797
        %833 = vmatprep.subr.mxu0 0.0
        %834 = vmatpush1.xpose.msra.mxu0 %v800
        %835 = vmatprep.subr.mxu0 0.0
        %836 = vmatpush1.xpose.msra.mxu0 %v803
        %837 = vmatprep.subr.mxu0 0.0
        %838 = vmatpush1.xpose.msra.mxu0 0.0
        %839 = vmatprep.subr.mxu0 0.0
        %840 = vmatpush1.xpose.msra.mxu0 0.0
        %841 = vmatprep.subr.mxu0 0.0
        %842 = vmatpush1.xpose.msra.mxu0 0.0
        %843 = vmatprep.subr.mxu0 0.0
        %844 = vmatpush1.xpose.msra.mxu0 0.0
        %845 = vmatprep.subr.mxu0 0.0
        %846 = vmatpush1.xpose.msra.mxu0 0.0
        %847 = vmatprep.subr.mxu0 0.0
        %848 = vmatpush1.xpose.msra.mxu0 0.0
        %849 = vmatprep.subr.mxu0 0.0
        %850 = vmatpush1.xpose.msra.mxu0 0.0
        %851 = vmatprep.subr.mxu0 0.0
        %852 = vmatpush1.xpose.msra.mxu0 0.0
        %853 = vmatprep.subr.mxu0 0.0
        %854 = vmatpush1.xpose.msra.mxu0 0.0
        %855 = vmatprep.subr.mxu0 0.0
        %856 = vmatpush1.xpose.msra.mxu0 0.0
        %857 = vmatprep.subr.mxu0 0.0
        %858 = vmatpush1.xpose.msra.mxu0 0.0
        %859 = vmatprep.subr.mxu0 0.0
        %860 = vmatpush1.xpose.msra.mxu0 0.0
        %861 = vmatprep.subr.mxu0 0.0
        %862 = vmatpush1.xpose.msra.mxu0 0.0
        %863 = vmatprep.subr.mxu0 0.0
        %864 = vmatpush1.xpose.msra.mxu0 0.0
        %865 = vmatprep.subr.mxu0 0.0
        %866 = vmatpush1.xpose.msra.mxu0 0.0
        %867 = vmatprep.subr.mxu0 0.0
        %868 = vmatpush1.xpose.msra.mxu0 0.0
        %869 = vmatprep.mubr.f32.mxu0 0.0
        %870 = vmatmul.mubr.f32.gmra.mrb[0].mxu0 %v755
        %v871 = vpop.f32.mrb[0].mxu0
        %v872 = vadd.f32 %v753, %v871
        %v873 = vpop.f32.mrb[0].mxu0
        %874 = vdwg.mxu0
        %v875 = vxor.u32 %v872, 2147483648
        %v876 = vmul.f32 %v875, 1.442695
        %v877 = vpow.pop %v876
        %v878 = vadd.f32 %v877, 1.0
        %v879 = vrcp.pop %v878
        %v880 = vmul.f32 1.0, %v879
        %881 = vst [vmem:[%s272] sm:$0x1] %v880
        %s882 = sand.u32 %s182, 1
        %s883 = scalar_lea.sflag [#allocation4], %s882
        %s884 = sand.u32 %s182, 1
        %s885 = scalar_lea.vmem [#allocation3], %s884
        // Predicated region
        $region49: #{neural_network3_forward.1} parent=47 // pred_check
          %p886 = pneg %p192
        $region50: #{neural_network3_forward.1} parent=47 // pred_check_branch
          %888 = sbr.rel (%p886) target = $region52
        $region51: #{neural_network3_forward.1} parent=47 // pred_region
          %s890 = ssub.s32 16, 16
          %891 = vsyncadd %s883, %s890
          %s892 = smul.addr %s22, 16
          %s893 = scalar_lea.hbm %s7, %s892
          %s895 = sshll.u32 %s885, 4
          %s896 = int_to_ptr.vmem [resolvable:$true] %s895
          %898 = dma.vmem_to_hbm [thread:$0]  %s896, 16, %s893, %s883
        $region52: #{neural_network3_forward.1} parent=47 // pred_fallthru
          _
      $region48: #{neural_network3_forward.1} parent=5 // pred_fallthru
        _
      %p899 = scmp.le.s32.totalorder 2, %s17
      // Predicated region
      $region53: #{neural_network3_forward.1} parent=5 // pred_check
        %p900 = pneg %p899
      $region54: #{neural_network3_forward.1} parent=5 // pred_check_branch
        %902 = sbr.rel (%p900) target = $region56
      $region55: #{neural_network3_forward.1} parent=5 // pred_region
        %s903 = ssub.s32 %s17, 2
        // Predicated region
        $region57: #{neural_network3_forward.1} parent=55 // pred_check
          %p904 = pneg %p198
        $region58: #{neural_network3_forward.1} parent=55 // pred_check_branch
          %906 = sbr.rel (%p904) target = $region60
        $region59: #{neural_network3_forward.1} parent=55 // pred_region
          %s907 = sand.u32 %s183, 1
          %s908 = scalar_lea.sflag [#allocation4], %s907
          %s909 = sand.u32 %s183, 1
          %s910 = scalar_lea.vmem [#allocation3], %s909
          %911 = dma.done %s908, 16
        $region60: #{neural_network3_forward.1} parent=55 // pred_fallthru
          _
      $region56: #{neural_network3_forward.1} parent=5 // pred_fallthru
        _
    $region6: #{neural_network3_forward.1} parent=1 // loop_footer
      %s21 = sadd.s32 1, %s17
    $region7: #{neural_network3_forward.1} parent=1 // loop_footer_branch
      %16 = sbr.rel target = $region3
    $region8: #{neural_network3_forward.1} parent=1 // loop_exit
      _
    %912 = vsyncpa [#allocation4], 1
    %s913 = scalar_lea.sflag [#allocation4], 1
    %914 = vsyncpa %s913, 1

</llo_original>
